<compile_context>
chip_gen: v7x
topology: tpu7x:2x2x1
jax: 0.10.0
libtpu: 0.0.40
codegen_flags: <defaults>
</compile_context>

<pallas_src>
import math
import functools

import numpy as np
import jax
import jax.numpy as jnp
from jax.experimental import pallas as pl
from jax.experimental.pallas import tpu as pltpu


# ----------------------------------------------------------------------------
# Parameter glue (plain JAX): weight normalization (normalize_weight_jit).
# ----------------------------------------------------------------------------
def normalize_weight(weight_oihw, log_weight_norm):
    n = jnp.exp(log_weight_norm)
    wn = jnp.sqrt(jnp.sum(weight_oihw * weight_oihw, axis=(1, 2, 3),
                          keepdims=True))
    return n * weight_oihw / (wn + 1e-5)


# ----------------------------------------------------------------------------
# Tiling helpers.
# ----------------------------------------------------------------------------
def _largest_lane_divisor(hw, cap):
    """Largest t <= cap with t % 128 == 0 and hw % t == 0, else None."""
    t = min(cap, hw)
    t -= t % 128
    while t >= 128:
        if hw % t == 0:
            return t
        t -= 128
    return None


def _largest_divisor_leq(n, cap):
    for d in range(max(1, min(n, cap)), 0, -1):
        if n % d == 0:
            return d
    return 1


def _choose_tiling(B, Cin, Cout, HW, dtype_bytes):
    """Pick (Bblk, T) so each grid step moves ~2 MiB of payload."""
    per_lane = (2 * Cout + Cin) * dtype_bytes        # x1 + out + x2, per lane
    total = per_lane * HW * B
    TARGET = 2 << 20                                 # ~2 MiB payload per step
    TINY = 1 << 20                                   # single-step threshold

    if total <= TINY:
        return B, HW                                 # one grid step, min overhead

    if HW % 128 == 0:
        T = _largest_lane_divisor(HW, max(128, TARGET // per_lane)) or HW
    else:
        # Lane-masked fallback; the block must span the full spatial extent.
        # TODO(synk): pad HW to a multiple of 128 in the wrapper only if a
        # measurement shows masked stores cost more than the pad/crop traffic.
        T = HW

    step = per_lane * T
    Bblk = _largest_divisor_leq(B, max(1, TARGET // step)) if step < TARGET else 1

    # v7x shards "parallel" grid axes over its 2 TensorCores: keep >= 2 steps
    # for non-tiny problems (v5e/v6e are single-TC and unaffected).
    if (B // Bblk) * (HW // T) < 2:
        if Bblk > 1:
            Bblk = _largest_divisor_leq(B, Bblk // 2)
        elif HW % 256 == 0:
            T = _largest_lane_divisor(HW, T // 2) or T
    return Bblk, T


# ----------------------------------------------------------------------------
# Pallas kernel: fused 1x1 conv (channel mix) + bias + residual add.
# ----------------------------------------------------------------------------
def enc_combiner_kernel(x1_ref, x2_ref, w_ref, b_ref, o_ref, *,
                        cin, bblk, chunk, n_chunks, use_mxu):
    # x1_ref: (Bblk, Cout, T)  residual input (channels->sublanes, HW->lanes)
    # x2_ref: (Bblk, Cin,  T)  conv input
    # w_ref : (Cout, Cin)      weight-normalized 1x1 weights
    # b_ref : (Cout, 1)        bias (f32)
    # o_ref : (Bblk, Cout, T)
    w = w_ref[...].astype(jnp.float32)
    bias = b_ref[...]                                          # (Cout, 1)
    # Hoisted once per grid step (JAX does not CSE broadcasts inside loops).
    w_cols = None if use_mxu else [w[:, i:i + 1] for i in range(cin)]

    unroll = min(n_chunks, 8)

    for b in range(bblk):                                      # small static unroll
        def slab(c, carry):
            start = pl.multiple_of(c * chunk, chunk)
            sl = pl.ds(start, chunk)
            x2 = x2_ref[b, :, sl].astype(jnp.float32)          # (Cin,  chunk)
            acc = x1_ref[b, :, sl].astype(jnp.float32) + bias  # (Cout, chunk)
            if use_mxu:
                # Wide-channel path: MXU matmul, explicit f32-exact precision.
                acc = acc + jnp.dot(w, x2,
                                    precision=jax.lax.Precision.HIGHEST,
                                    preferred_element_type=jnp.float32)
            else:
                # Tiny-channel path: unrolled broadcast-MAC on the VPU.
                for i in range(cin):
                    acc = acc + w_cols[i] * x2[i:i + 1, :]
            o_ref[b, :, sl] = acc.astype(o_ref.dtype)
            return carry

        jax.lax.fori_loop(0, n_chunks, slab, 0, unroll=unroll)


def enc_combiner_forward(x1, x2, weight, bias, log_weight_norm, *,
                         alias_x1=False):
    """EncCombinerCell.forward: x1 + Conv2D_1x1(x2)   (NCHW in, NCHW out)."""
    B, Cout, H, W = x1.shape
    _, Cin, _, _ = x2.shape
    HW = H * W
    dtype_bytes = x1.dtype.itemsize

    w_mat = normalize_weight(weight, log_weight_norm).reshape(Cout, Cin)
    bias2d = bias.reshape(Cout, 1).astype(jnp.float32)

    # Free reshapes (no data movement): keep NCHW, flatten spatial into lanes.
    x1f = x1.reshape(B, Cout, HW)
    x2f = x2.reshape(B, Cin, HW)

    Bblk, T = _choose_tiling(B, Cin, Cout, HW, dtype_bytes)
    nb, nt = B // Bblk, HW // T

    # ~512-lane compute slabs inside a grid step bound the live vreg set.
    chunk = (_largest_lane_divisor(T, 512) or T) if T % 128 == 0 else T
    n_chunks = T // chunk

    # Switch to the MXU once the channel mix would saturate the VALU slot
    # (~Cin >= 16 on v6e/v7x); tiny channel counts stay on the VPU.
    use_mxu = Cin >= 16

    kernel = functools.partial(enc_combiner_kernel, cin=Cin, bblk=Bblk,
                               chunk=chunk, n_chunks=n_chunks, use_mxu=use_mxu)

    # Double-buffered per-step footprint + headroom; safe on every generation
    # (v5e 16 MiB scoped default, v6e/v7x 32 MiB scoped default).
    step_bytes = Bblk * (2 * Cout + Cin) * T * dtype_bytes
    vmem_limit = int(min(32 << 20, max(16 << 20, 4 * step_bytes + (2 << 20))))

    out = pl.pallas_call(
        kernel,
        out_shape=jax.ShapeDtypeStruct((B, Cout, HW), x1.dtype),
        grid=(nb, nt),
        in_specs=[
            pl.BlockSpec((Bblk, Cout, T), lambda b, t: (b, 0, t)),
            pl.BlockSpec((Bblk, Cin, T), lambda b, t: (b, 0, t)),
            pl.BlockSpec((Cout, Cin), lambda b, t: (0, 0)),
            pl.BlockSpec((Cout, 1), lambda b, t: (0, 0)),
        ],
        out_specs=pl.BlockSpec((Bblk, Cout, T), lambda b, t: (b, 0, t)),
        compiler_params=pltpu.CompilerParams(
            dimension_semantics=("parallel", "parallel"),
            vmem_limit_bytes=vmem_limit),
        input_output_aliases=({0: 0} if alias_x1 else {}),
    )(x1f, x2f, w_mat, bias2d)

    return out.reshape(B, Cout, H, W)


# ----------------------------------------------------------------------------
# Reference (plain JAX) for a correctness check.
# ----------------------------------------------------------------------------
def enc_combiner_reference(x1, x2, weight, bias, log_weight_norm):
    Cout, Cin = weight.shape[0], weight.shape[1]
    w = normalize_weight(weight, log_weight_norm).reshape(Cout, Cin)
    conv = jnp.einsum('oi,bihw->bohw', w, x2,
                      precision=jax.lax.Precision.HIGHEST)
    return x1 + conv + bias.reshape(1, -1, 1, 1)


if __name__ == "__main__":
    # EncCombinerCell(Cin1=8, Cin2=4, Cout=8, cell_type=...) — cell_type is
    # unused in forward.  x1 must have Cout channels for the residual add.
    # TODO(synk): Conv2D's data_init path (data-dependent one-off bias /
    # log_weight_norm re-init) is a training-time side effect and is not
    # implemented; EncCombinerCell uses data_init=False so forward is exact.
    B, Cin1, Cin2, Cout, H, W = 2, 8, 4, 8, 16, 16

    key = jax.random.PRNGKey(0)
    k1, k2, kw, kb = jax.random.split(key, 4)

    x1 = jax.random.normal(k1, (B, Cin1, H, W), dtype=jnp.float32)
    x2 = jax.random.normal(k2, (B, Cin2, H, W), dtype=jnp.float32)

    # PyTorch Conv2d-style uniform init bounds (fan_in = Cin2 * 1 * 1).
    fan_in = Cin2
    bound = 1.0 / math.sqrt(fan_in)
    weight = jax.random.uniform(kw, (Cout, Cin2, 1, 1), dtype=jnp.float32,
                                minval=-bound, maxval=bound)
    bias = jax.random.uniform(kb, (Cout,), dtype=jnp.float32,
                              minval=-bound, maxval=bound)

    # log_weight_norm init exactly as in Conv2D.__init__: log(||w|| + 0.01)
    wn0 = jnp.sqrt(jnp.sum(weight * weight, axis=(1, 2, 3), keepdims=True))
    log_weight_norm = jnp.log(wn0 + 0.01)

    out = enc_combiner_forward(x1, x2, weight, bias, log_weight_norm)
    out = jax.block_until_ready(out)

    ref = enc_combiner_reference(x1, x2, weight, bias, log_weight_norm)
    np.testing.assert_allclose(np.asarray(out), np.asarray(ref),
                               rtol=1e-4, atol=1e-4)

    print("KERNEL_OK")
</pallas_src>

<mosaic_0001>
module attributes {stable_mosaic.version = 11 : i64} {
  func.func @enc_combiner_kernel(%arg0: i32, %arg1: i32, %arg2: memref<2x8x256xf32, #tpu.memory_space<vmem>>, %arg3: memref<2x4x256xf32, #tpu.memory_space<vmem>>, %arg4: memref<8x4xf32, #tpu.memory_space<vmem>>, %arg5: memref<8x1xf32, #tpu.memory_space<vmem>>, %arg6: memref<2x8x256xf32, #tpu.memory_space<vmem>>) attributes {dimension_semantics = [#tpu.dimension_semantics<parallel>, #tpu.dimension_semantics<parallel>], iteration_bounds = array<i64: 1, 1>, scalar_prefetch = 0 : i64, scratch_operands = 0 : i64, tpu.core_type = #tpu.core_type<tc>, window_params = [{transform_indices = @transform_0, window_bounds = array<i64: 2, 8, 256>}, {transform_indices = @transform_1, window_bounds = array<i64: 2, 4, 256>}, {pipeline_mode = #tpu.pipeline_mode<synchronous>, transform_indices = @transform_2, window_bounds = array<i64: 8, 4>}, {pipeline_mode = #tpu.pipeline_mode<synchronous>, transform_indices = @transform_3, window_bounds = array<i64: 8, 1>}, {transform_indices = @transform_4, window_bounds = array<i64: 2, 8, 256>}]} {
    %c0 = arith.constant 0 : index
    %c0_0 = arith.constant 0 : index
    %0 = vector.load %arg4[%c0, %c0_0] : memref<8x4xf32, #tpu.memory_space<vmem>>, vector<8x4xf32>
    %c0_1 = arith.constant 0 : index
    %c0_2 = arith.constant 0 : index
    %1 = vector.load %arg5[%c0_1, %c0_2] : memref<8x1xf32, #tpu.memory_space<vmem>>, vector<8x1xf32>
    %2 = vector.extract_strided_slice %0 {offsets = [0, 0], sizes = [8, 1], strides = [1, 1]} : vector<8x4xf32> to vector<8x1xf32>
    %3 = vector.extract_strided_slice %0 {offsets = [0, 1], sizes = [8, 1], strides = [1, 1]} : vector<8x4xf32> to vector<8x1xf32>
    %4 = vector.extract_strided_slice %0 {offsets = [0, 2], sizes = [8, 1], strides = [1, 1]} : vector<8x4xf32> to vector<8x1xf32>
    %5 = vector.extract_strided_slice %0 {offsets = [0, 3], sizes = [8, 1], strides = [1, 1]} : vector<8x4xf32> to vector<8x1xf32>
    %c0_i32 = arith.constant 0 : i32
    %c256_i32 = arith.constant 256 : i32
    %6 = arith.muli %c0_i32, %c256_i32 : i32
    %7 = tpu.assume_multiple %6, 256 : i32
    %c0_3 = arith.constant 0 : index
    %c0_4 = arith.constant 0 : index
    %8 = arith.index_cast %7 : i32 to index
    %9 = vector.load %arg3[%c0_3, %c0_4, %8] : memref<2x4x256xf32, #tpu.memory_space<vmem>>, vector<1x4x256xf32>
    %10 = vector.shape_cast %9 : vector<1x4x256xf32> to vector<4x256xf32>
    %c0_5 = arith.constant 0 : index
    %c0_6 = arith.constant 0 : index
    %11 = arith.index_cast %7 : i32 to index
    %12 = vector.load %arg2[%c0_5, %c0_6, %11] : memref<2x8x256xf32, #tpu.memory_space<vmem>>, vector<1x8x256xf32>
    %13 = vector.shape_cast %12 : vector<1x8x256xf32> to vector<8x256xf32>
    %14 = vector.broadcast %1 : vector<8x1xf32> to vector<8x256xf32>
    %15 = arith.addf %13, %14 : vector<8x256xf32>
    %16 = vector.extract_strided_slice %10 {offsets = [0, 0], sizes = [1, 256], strides = [1, 1]} : vector<4x256xf32> to vector<1x256xf32>
    %17 = vector.broadcast %2 : vector<8x1xf32> to vector<8x256xf32>
    %18 = vector.broadcast %16 : vector<1x256xf32> to vector<8x256xf32>
    %19 = arith.mulf %17, %18 : vector<8x256xf32>
    %20 = arith.addf %15, %19 : vector<8x256xf32>
    %21 = vector.extract_strided_slice %10 {offsets = [1, 0], sizes = [1, 256], strides = [1, 1]} : vector<4x256xf32> to vector<1x256xf32>
    %22 = vector.broadcast %3 : vector<8x1xf32> to vector<8x256xf32>
    %23 = vector.broadcast %21 : vector<1x256xf32> to vector<8x256xf32>
    %24 = arith.mulf %22, %23 : vector<8x256xf32>
    %25 = arith.addf %20, %24 : vector<8x256xf32>
    %26 = vector.extract_strided_slice %10 {offsets = [2, 0], sizes = [1, 256], strides = [1, 1]} : vector<4x256xf32> to vector<1x256xf32>
    %27 = vector.broadcast %4 : vector<8x1xf32> to vector<8x256xf32>
    %28 = vector.broadcast %26 : vector<1x256xf32> to vector<8x256xf32>
    %29 = arith.mulf %27, %28 : vector<8x256xf32>
    %30 = arith.addf %25, %29 : vector<8x256xf32>
    %31 = vector.extract_strided_slice %10 {offsets = [3, 0], sizes = [1, 256], strides = [1, 1]} : vector<4x256xf32> to vector<1x256xf32>
    %32 = vector.broadcast %5 : vector<8x1xf32> to vector<8x256xf32>
    %33 = vector.broadcast %31 : vector<1x256xf32> to vector<8x256xf32>
    %34 = arith.mulf %32, %33 : vector<8x256xf32>
    %35 = arith.addf %30, %34 : vector<8x256xf32>
    %c0_7 = arith.constant 0 : index
    %c0_8 = arith.constant 0 : index
    %36 = arith.index_cast %7 : i32 to index
    %37 = vector.load %arg6[%c0_7, %c0_8, %36] : memref<2x8x256xf32, #tpu.memory_space<vmem>>, vector<1x8x256xf32>
    %38 = vector.shape_cast %37 : vector<1x8x256xf32> to vector<8x256xf32>
    %39 = vector.shape_cast %35 : vector<8x256xf32> to vector<1x8x256xf32>
    tpu.vector_store %arg6[%c0_7, %c0_8, %36], %39 {strides = array<i32>} : memref<2x8x256xf32, #tpu.memory_space<vmem>>, vector<1x8x256xf32>,
    %c1_i32 = arith.constant 1 : i32
    %c0_i32_9 = arith.constant 0 : i32
    %c256_i32_10 = arith.constant 256 : i32
    %40 = arith.muli %c0_i32_9, %c256_i32_10 : i32
    %41 = tpu.assume_multiple %40, 256 : i32
    %c1 = arith.constant 1 : index
    %c0_11 = arith.constant 0 : index
    %42 = arith.index_cast %41 : i32 to index
    %43 = vector.load %arg3[%c1, %c0_11, %42] : memref<2x4x256xf32, #tpu.memory_space<vmem>>, vector<1x4x256xf32>
    %44 = vector.shape_cast %43 : vector<1x4x256xf32> to vector<4x256xf32>
    %c1_12 = arith.constant 1 : index
    %c0_13 = arith.constant 0 : index
    %45 = arith.index_cast %41 : i32 to index
    %46 = vector.load %arg2[%c1_12, %c0_13, %45] : memref<2x8x256xf32, #tpu.memory_space<vmem>>, vector<1x8x256xf32>
    %47 = vector.shape_cast %46 : vector<1x8x256xf32> to vector<8x256xf32>
    %48 = vector.broadcast %1 : vector<8x1xf32> to vector<8x256xf32>
    %49 = arith.addf %47, %48 : vector<8x256xf32>
    %50 = vector.extract_strided_slice %44 {offsets = [0, 0], sizes = [1, 256], strides = [1, 1]} : vector<4x256xf32> to vector<1x256xf32>
    %51 = vector.broadcast %2 : vector<8x1xf32> to vector<8x256xf32>
    %52 = vector.broadcast %50 : vector<1x256xf32> to vector<8x256xf32>
    %53 = arith.mulf %51, %52 : vector<8x256xf32>
    %54 = arith.addf %49, %53 : vector<8x256xf32>
    %55 = vector.extract_strided_slice %44 {offsets = [1, 0], sizes = [1, 256], strides = [1, 1]} : vector<4x256xf32> to vector<1x256xf32>
    %56 = vector.broadcast %3 : vector<8x1xf32> to vector<8x256xf32>
    %57 = vector.broadcast %55 : vector<1x256xf32> to vector<8x256xf32>
    %58 = arith.mulf %56, %57 : vector<8x256xf32>
    %59 = arith.addf %54, %58 : vector<8x256xf32>
    %60 = vector.extract_strided_slice %44 {offsets = [2, 0], sizes = [1, 256], strides = [1, 1]} : vector<4x256xf32> to vector<1x256xf32>
    %61 = vector.broadcast %4 : vector<8x1xf32> to vector<8x256xf32>
    %62 = vector.broadcast %60 : vector<1x256xf32> to vector<8x256xf32>
    %63 = arith.mulf %61, %62 : vector<8x256xf32>
    %64 = arith.addf %59, %63 : vector<8x256xf32>
    %65 = vector.extract_strided_slice %44 {offsets = [3, 0], sizes = [1, 256], strides = [1, 1]} : vector<4x256xf32> to vector<1x256xf32>
    %66 = vector.broadcast %5 : vector<8x1xf32> to vector<8x256xf32>
    %67 = vector.broadcast %65 : vector<1x256xf32> to vector<8x256xf32>
    %68 = arith.mulf %66, %67 : vector<8x256xf32>
    %69 = arith.addf %64, %68 : vector<8x256xf32>
    %c1_14 = arith.constant 1 : index
    %c0_15 = arith.constant 0 : index
    %70 = arith.index_cast %41 : i32 to index
    %71 = vector.load %arg6[%c1_14, %c0_15, %70] : memref<2x8x256xf32, #tpu.memory_space<vmem>>, vector<1x8x256xf32>
    %72 = vector.shape_cast %71 : vector<1x8x256xf32> to vector<8x256xf32>
    %73 = vector.shape_cast %69 : vector<8x256xf32> to vector<1x8x256xf32>
    tpu.vector_store %arg6[%c1_14, %c0_15, %70], %73 {strides = array<i32>} : memref<2x8x256xf32, #tpu.memory_space<vmem>>, vector<1x8x256xf32>,
    %c1_i32_16 = arith.constant 1 : i32
    return
  }
  func.func @transform_0(%arg0: i32, %arg1: i32) -> (i32, i32, i32) {
    %c0_i32 = arith.constant 0 : i32
    %c0_i32_0 = arith.constant 0 : i32
    return %arg0, %c0_i32, %arg1 : i32, i32, i32
  }
  func.func @transform_1(%arg0: i32, %arg1: i32) -> (i32, i32, i32) {
    %c0_i32 = arith.constant 0 : i32
    %c0_i32_0 = arith.constant 0 : i32
    return %arg0, %c0_i32, %arg1 : i32, i32, i32
  }
  func.func @transform_2(%arg0: i32, %arg1: i32) -> (i32, i32) {
    %c0_i32 = arith.constant 0 : i32
    %c0_i32_0 = arith.constant 0 : i32
    %c0_i32_1 = arith.constant 0 : i32
    return %c0_i32, %c0_i32_0 : i32, i32
  }
  func.func @transform_3(%arg0: i32, %arg1: i32) -> (i32, i32) {
    %c0_i32 = arith.constant 0 : i32
    %c0_i32_0 = arith.constant 0 : i32
    %c0_i32_1 = arith.constant 0 : i32
    return %c0_i32, %c0_i32_0 : i32, i32
  }
  func.func @transform_4(%arg0: i32, %arg1: i32) -> (i32, i32, i32) {
    %c0_i32 = arith.constant 0 : i32
    %c0_i32_0 = arith.constant 0 : i32
    return %arg0, %c0_i32, %arg1 : i32, i32, i32
  }
}

</mosaic_0001>

<llo_original>
// kernel: tpu_custom_call.1
$region0: #{tpu_custom_call.1}
  #allocation0 [shape = 'u32[]', space=smem, size = 0x4, offset = 0x4, fixed_abs, tag = 'smem constant byte address 0x4 - core index']
  #allocation1 [shape = 'u32[144,128]{1,0:T(1,128)}', space=vmem, size = 0x12000, scoped, tag = 'internal scratch']
  %s0 = inlined_call_operand.hbm [shape: f32[2,8,256], index: 0, kind: input, shape index: {}]
  %s1 = inlined_call_operand.vmem [shape: f32[2,4,256], index: 1, kind: input, shape index: {}]
  %s2 = inlined_call_operand.vmem [shape: f32[8,4], index: 2, kind: input, shape index: {}]
  %s3 = inlined_call_operand.vmem [shape: f32[8,1], index: 3, kind: input, shape index: {}]
  %s4 = inlined_call_operand.hbm [shape: f32[2,8,256], index: 4, kind: output, shape index: {}]
  %s5 = sld [smem:[#allocation0]]
  $region30: #{tpu_custom_call.1} parent=0
    _
  %s7 = ssub.s32 1, %s5
  %s8 = scalar_select 0, %s7, %s5
  $region1: #{tpu_custom_call.1} parent=0
    #allocation2 [shape = 'u8[16384]{0}', space=vmem, size = 0x4000, scoped, tag = 'input window, operand 0, single buffered']
    #allocation3 [shape = 's32[1]{0}', space=sflag, size = 0x4, scoped, tag = 'scoped memory for tpu_custom_call.1']
    #allocation4 [shape = 's32[1]{0}', space=sflag, size = 0x4, scoped, tag = 'scoped memory for tpu_custom_call.1']
    #allocation5 [shape = 'u8[16384]{0}', space=vmem, size = 0x4000, scoped, tag = 'output window, operand 0, single buffered']
    %9 = vsyncpa [#allocation3], 0
    %10 = vsyncpa [#allocation4], 0
    // Predicated region
    $region2: #{tpu_custom_call.1} parent=1 // pred_check
      _
    $region3: #{tpu_custom_call.1} parent=1 // pred_check_branch
      %12 = sbr.rel (0) target = $region5
    $region4: #{tpu_custom_call.1} parent=1 // pred_region
      %s14 = ssub.s32 512, 512
      %15 = vsyncadd [#allocation3], %s14
      %s16 = sshll.u32 [#allocation2], 4
      %s17 = int_to_ptr.vmem [resolvable:$true] %s16
      %22 = dma.hbm_to_vmem [thread:$0]  %s0, 512, %s17, [#allocation3], 256, 256, 16
    $region5: #{tpu_custom_call.1} parent=1 // pred_fallthru
      _
    // Predicated region
    $region6: #{tpu_custom_call.1} parent=1 // pred_check
      _
    $region7: #{tpu_custom_call.1} parent=1 // pred_check_branch
      %24 = sbr.rel (0) target = $region9
    $region8: #{tpu_custom_call.1} parent=1 // pred_region
      _
    $region9: #{tpu_custom_call.1} parent=1 // pred_fallthru
      _
    // Predicated region
    $region10: #{tpu_custom_call.1} parent=1 // pred_check
      _
    $region11: #{tpu_custom_call.1} parent=1 // pred_check_branch
      %26 = sbr.rel (0) target = $region13
    $region12: #{tpu_custom_call.1} parent=1 // pred_region
      _
    $region13: #{tpu_custom_call.1} parent=1 // pred_fallthru
      _
    // Predicated region
    $region14: #{tpu_custom_call.1} parent=1 // pred_check
      _
    $region15: #{tpu_custom_call.1} parent=1 // pred_check_branch
      %28 = sbr.rel (0) target = $region17
    $region16: #{tpu_custom_call.1} parent=1 // pred_region
      _
    $region17: #{tpu_custom_call.1} parent=1 // pred_fallthru
      _
    // Predicated region
    $region18: #{tpu_custom_call.1} parent=1 // pred_check
      _
    $region19: #{tpu_custom_call.1} parent=1 // pred_check_branch
      %30 = sbr.rel (0) target = $region21
    $region20: #{tpu_custom_call.1} parent=1 // pred_region
      %31 = dma.done [#allocation3], 512
    $region21: #{tpu_custom_call.1} parent=1 // pred_fallthru
      _
    %v32 = vld [vmem:[%s2] sm:$0xff]
    %v33 = vld [vmem:[%s3] sm:$0xff]
    %v34 = vld [vmem:[%s1] sm:$0xff]
    %v35 = vld [vmem:[#allocation2] sm:$0xff]
    %v36 = vld [vmem:[#allocation2 + $0x8] sm:$0xff]
    %38 = vset.pattern.permute.xlu0 0
    %39 = vperm.xlu0 %38, %v33
    %v40 = vpop.permute.xlu0 %39
    %v42 = vadd.f32 %v35, %v40
    %v43 = vadd.f32 %v36, %v40
    %45 = vset.pattern.permute.xlu0 0
    %46 = vperm.xlu0 %45, %v32
    %v47 = vpop.permute.xlu0 %46
    %v50 = vlaneseq
    %v51 = vshrl.u32 %v50, 7
    %v52 = vsub.s32 0, %v51
    %v53 = vrot.slane %v34, %v52
    %v54 = vlaneseq
    %v55 = vshrl.u32 %v54, 7
    %v56 = vsub.s32 4, %v55
    %v57 = vrot.slane %v34, %v56
    %v60 = vlaneseq
    %v61 = vshrl.u32 %v60, 7
    %v62 = vsub.s32 0, %v61
    %v63 = vrot.slane %v53, %v62
    %v64 = vlaneseq
    %v65 = vshrl.u32 %v64, 7
    %v66 = vsub.s32 0, %v65
    %v67 = vrot.slane %v57, %v66
    %v68 = vmul.f32 %v47, %v63
    %v69 = vmul.f32 %v47, %v67
    %v70 = vadd.f32 %v42, %v68
    %v71 = vadd.f32 %v43, %v69
    %72 = vset.pattern.permute.xlu0 1
    %73 = vperm.xlu0 %72, %v32
    %v74 = vpop.permute.xlu0 %73
    %v76 = vlaneseq
    %v77 = vshrl.u32 %v76, 7
    %v78 = vsub.s32 1, %v77
    %v79 = vrot.slane %v34, %v78
    %v80 = vlaneseq
    %v81 = vshrl.u32 %v80, 7
    %v82 = vsub.s32 5, %v81
    %v83 = vrot.slane %v34, %v82
    %v86 = vlaneseq
    %v87 = vshrl.u32 %v86, 7
    %v88 = vsub.s32 1, %v87
    %v89 = vrot.slane %v79, %v88
    %v90 = vlaneseq
    %v91 = vshrl.u32 %v90, 7
    %v92 = vsub.s32 1, %v91
    %v93 = vrot.slane %v83, %v92
    %v94 = vmul.f32 %v74, %v89
    %v95 = vmul.f32 %v74, %v93
    %v96 = vadd.f32 %v70, %v94
    %v97 = vadd.f32 %v71, %v95
    %98 = vset.pattern.permute.xlu0 2
    %99 = vperm.xlu0 %98, %v32
    %v100 = vpop.permute.xlu0 %99
    %v102 = vlaneseq
    %v103 = vshrl.u32 %v102, 7
    %v104 = vsub.s32 2, %v103
    %v105 = vrot.slane %v34, %v104
    %v106 = vlaneseq
    %v107 = vshrl.u32 %v106, 7
    %v108 = vsub.s32 6, %v107
    %v109 = vrot.slane %v34, %v108
    %v112 = vlaneseq
    %v113 = vshrl.u32 %v112, 7
    %v114 = vsub.s32 2, %v113
    %v115 = vrot.slane %v105, %v114
    %v116 = vlaneseq
    %v117 = vshrl.u32 %v116, 7
    %v118 = vsub.s32 2, %v117
    %v119 = vrot.slane %v109, %v118
    %v120 = vmul.f32 %v100, %v115
    %v121 = vmul.f32 %v100, %v119
    %v122 = vadd.f32 %v96, %v120
    %v123 = vadd.f32 %v97, %v121
    %124 = vset.pattern.permute.xlu0 3
    %125 = vperm.xlu0 %124, %v32
    %v126 = vpop.permute.xlu0 %125
    %v128 = vlaneseq
    %v129 = vshrl.u32 %v128, 7
    %v130 = vsub.s32 3, %v129
    %v131 = vrot.slane %v34, %v130
    %v132 = vlaneseq
    %v133 = vshrl.u32 %v132, 7
    %v134 = vsub.s32 7, %v133
    %v135 = vrot.slane %v34, %v134
    %v138 = vlaneseq
    %v139 = vshrl.u32 %v138, 7
    %v140 = vsub.s32 3, %v139
    %v141 = vrot.slane %v131, %v140
    %v142 = vlaneseq
    %v143 = vshrl.u32 %v142, 7
    %v144 = vsub.s32 3, %v143
    %v145 = vrot.slane %v135, %v144
    %v146 = vmul.f32 %v126, %v141
    %v147 = vmul.f32 %v126, %v145
    %v148 = vadd.f32 %v122, %v146
    %v149 = vadd.f32 %v123, %v147
    %150 = vst [vmem:[#allocation5] sm:$0xff] %v148
    %151 = vst [vmem:[#allocation5 + $0x8] sm:$0xff] %v149
    %s152 = sadd.s32 0, 2
    %s153 = smul.addr %s152, 4
    %s154 = scalar_lea.vmem %s1, %s153
    %v155 = vld [vmem:[%s154] sm:$0xff]
    %s156 = smul.addr %s152, 8
    %s157 = scalar_lea.vmem [#allocation2], %s156
    %v158 = vld [vmem:[%s157] sm:$0xff]
    %v159 = vld [vmem:[%s157 + $0x8] sm:$0xff]
    %v160 = vadd.f32 %v158, %v40
    %v161 = vadd.f32 %v159, %v40
    %v163 = vlaneseq
    %v164 = vshrl.u32 %v163, 7
    %v165 = vsub.s32 0, %v164
    %v166 = vrot.slane %v155, %v165
    %v167 = vlaneseq
    %v168 = vshrl.u32 %v167, 7
    %v169 = vsub.s32 4, %v168
    %v170 = vrot.slane %v155, %v169
    %v173 = vlaneseq
    %v174 = vshrl.u32 %v173, 7
    %v175 = vsub.s32 0, %v174
    %v176 = vrot.slane %v166, %v175
    %v177 = vlaneseq
    %v178 = vshrl.u32 %v177, 7
    %v179 = vsub.s32 0, %v178
    %v180 = vrot.slane %v170, %v179
    %v181 = vmul.f32 %v47, %v176
    %v182 = vmul.f32 %v47, %v180
    %v183 = vadd.f32 %v160, %v181
    %v184 = vadd.f32 %v161, %v182
    %v185 = vlaneseq
    %v186 = vshrl.u32 %v185, 7
    %v187 = vsub.s32 1, %v186
    %v188 = vrot.slane %v155, %v187
    %v189 = vlaneseq
    %v190 = vshrl.u32 %v189, 7
    %v191 = vsub.s32 5, %v190
    %v192 = vrot.slane %v155, %v191
    %v195 = vlaneseq
    %v196 = vshrl.u32 %v195, 7
    %v197 = vsub.s32 1, %v196
    %v198 = vrot.slane %v188, %v197
    %v199 = vlaneseq
    %v200 = vshrl.u32 %v199, 7
    %v201 = vsub.s32 1, %v200
    %v202 = vrot.slane %v192, %v201
    %v203 = vmul.f32 %v74, %v198
    %v204 = vmul.f32 %v74, %v202
    %v205 = vadd.f32 %v183, %v203
    %v206 = vadd.f32 %v184, %v204
    %v207 = vlaneseq
    %v208 = vshrl.u32 %v207, 7
    %v209 = vsub.s32 2, %v208
    %v210 = vrot.slane %v155, %v209
    %v211 = vlaneseq
    %v212 = vshrl.u32 %v211, 7
    %v213 = vsub.s32 6, %v212
    %v214 = vrot.slane %v155, %v213
    %v217 = vlaneseq
    %v218 = vshrl.u32 %v217, 7
    %v219 = vsub.s32 2, %v218
    %v220 = vrot.slane %v210, %v219
    %v221 = vlaneseq
    %v222 = vshrl.u32 %v221, 7
    %v223 = vsub.s32 2, %v222
    %v224 = vrot.slane %v214, %v223
    %v225 = vmul.f32 %v100, %v220
    %v226 = vmul.f32 %v100, %v224
    %v227 = vadd.f32 %v205, %v225
    %v228 = vadd.f32 %v206, %v226
    %v229 = vlaneseq
    %v230 = vshrl.u32 %v229, 7
    %v231 = vsub.s32 3, %v230
    %v232 = vrot.slane %v155, %v231
    %v233 = vlaneseq
    %v234 = vshrl.u32 %v233, 7
    %v235 = vsub.s32 7, %v234
    %v236 = vrot.slane %v155, %v235
    %v239 = vlaneseq
    %v240 = vshrl.u32 %v239, 7
    %v241 = vsub.s32 3, %v240
    %v242 = vrot.slane %v232, %v241
    %v243 = vlaneseq
    %v244 = vshrl.u32 %v243, 7
    %v245 = vsub.s32 3, %v244
    %v246 = vrot.slane %v236, %v245
    %v247 = vmul.f32 %v126, %v242
    %v248 = vmul.f32 %v126, %v246
    %v249 = vadd.f32 %v227, %v247
    %v250 = vadd.f32 %v228, %v248
    %s251 = smul.addr %s152, 8
    %s252 = scalar_lea.vmem [#allocation5], %s251
    %253 = vst [vmem:[%s252] sm:$0xff] %v249
    %254 = vst [vmem:[%s252 + $0x8] sm:$0xff] %v250
    // Predicated region
    $region22: #{tpu_custom_call.1} parent=1 // pred_check
      _
    $region23: #{tpu_custom_call.1} parent=1 // pred_check_branch
      %256 = sbr.rel (0) target = $region25
    $region24: #{tpu_custom_call.1} parent=1 // pred_region
      %s258 = ssub.s32 512, 512
      %259 = vsyncadd [#allocation4], %s258
      %s260 = sshll.u32 [#allocation5], 4
      %s261 = int_to_ptr.vmem [resolvable:$true] %s260
      %266 = dma.vmem_to_hbm [thread:$0]  %s261, 512, %s4, [#allocation4], 256, 256, 16
    $region25: #{tpu_custom_call.1} parent=1 // pred_fallthru
      _
    // Predicated region
    $region26: #{tpu_custom_call.1} parent=1 // pred_check
      _
    $region27: #{tpu_custom_call.1} parent=1 // pred_check_branch
      %268 = sbr.rel (0) target = $region29
    $region28: #{tpu_custom_call.1} parent=1 // pred_region
      %269 = dma.done [#allocation4], 512
    $region29: #{tpu_custom_call.1} parent=1 // pred_fallthru
      _
    %270 = vsyncpa [#allocation3], 1
    %271 = vsyncpa [#allocation4], 1

</llo_original>
